<compile_context>
chip_gen: v5e
topology: v5e:2x2
jax: 0.10.0
libtpu: 0.0.40
codegen_flags: <defaults>
</compile_context>

<pallas_src>
import jax
import jax.numpy as jnp
from jax.experimental import pallas as pl
from jax.experimental.pallas import tpu as pltpu


def folded_mlp_kernel(x_ref, w_ref, b_ref, o_ref):
    # Single fused affine on one batch tile: (TB, K) @ (K, N) + (1, N)
    y = jnp.dot(x_ref[...], w_ref[...], preferred_element_type=jnp.float32)
    o_ref[...] = (y + b_ref[...]).astype(o_ref.dtype)


def fold_params(w1_t, b1, w2_t, b2):
    """Fold the two affine layers into one (valid ONLY because the hidden
    Sequential of torch_organization_model(hidden_units=[128]) is empty, i.e.
    there is no nonlinearity between input_layer and output_layer):
        (x @ W1 + b1) @ W2 + b2  ==  x @ (W1 @ W2) + (b1 @ W2 + b2)
    Call once when weights are static and reuse the result."""
    w = w1_t @ w2_t            # (in_dim, out_dim)
    b = b1 @ w2_t + b2         # (1, out_dim)
    return w, b


def organization_model_forward_folded(x, w, b, *, tile_b=8192):
    """y = x @ w + b with w/b already folded.  x: (B, in_dim) f32."""
    B, in_dim = x.shape
    k_w, out_dim = w.shape
    assert in_dim == k_w, (in_dim, k_w)
    assert tile_b % 8 == 0

    # Batch tile: either the whole batch (block dim == full array dim is always
    # legal) or `tile_b` rows (multiple of 8 sublanes).  No jnp.pad of x: the
    # ragged last block (if any) is handled by Pallas' masked writeback; its
    # out-of-bounds input rows only affect output rows that are never stored.
    tb = B if B <= tile_b else tile_b
    grid = (pl.cdiv(B, tb),)

    cost = pl.CostEstimate(
        flops=2 * B * in_dim * out_dim,
        transcendentals=0,
        bytes_accessed=4 * (B * in_dim + in_dim * out_dim + out_dim + B * out_dim),
    )

    return pl.pallas_call(
        folded_mlp_kernel,
        out_shape=jax.ShapeDtypeStruct((B, out_dim), jnp.float32),
        grid_spec=pltpu.PrefetchScalarGridSpec(
            num_scalar_prefetch=0,
            grid=grid,
            in_specs=[
                # x: one batch tile per grid step (double-buffered by Pallas).
                pl.BlockSpec((tb, in_dim), lambda i: (i, 0)),
                # Folded weight + bias: constant block index -> DMA'd once,
                # VMEM-resident for the whole grid.
                pl.BlockSpec((in_dim, out_dim), lambda i: (0, 0)),
                pl.BlockSpec((1, out_dim), lambda i: (0, 0)),
            ],
            # Lane dim = 64 == full array dim (legal); writing it directly
            # avoids the pad + post-kernel slice HBM traffic.
            out_specs=pl.BlockSpec((tb, out_dim), lambda i: (i, 0)),
        ),
        compiler_params=pltpu.CompilerParams(
            # Independent batch tiles: shard across TensorCores on v7x megacore.
            dimension_semantics=("parallel",),
        ),
        cost_estimate=cost,
    )(x, w, b)


def organization_model_forward(x, w1_t, b1, w2_t, b2, *, tile_b=8192):
    """Convenience wrapper: fold per call (prefer fold_params() + the folded
    forward when the weights are static)."""
    w, b = fold_params(w1_t, b1, w2_t, b2)
    return organization_model_forward_folded(x, w, b, tile_b=tile_b)


def init_params(key, input_dim=89, hidden_units=(128,), out_dim=64):
    """Deterministic init matching nn.Linear's default U(-1/sqrt(fan_in), ...).
    Weights stored as (in, out) == transpose of PyTorch's (out, in) layout."""
    # Guard for the algebraic fold: with >1 hidden unit spec the PyTorch module
    # inserts ReLUs and the fold in fold_params() would be WRONG.
    assert len(hidden_units) == 1, "fold requires an empty hidden Sequential"
    hidden = hidden_units[0]
    k1, k2, k3, k4 = jax.random.split(key, 4)
    bound1 = 1.0 / jnp.sqrt(input_dim)
    bound2 = 1.0 / jnp.sqrt(hidden)
    w1_t = jax.random.uniform(k1, (input_dim, hidden), jnp.float32, -bound1, bound1)
    b1 = jax.random.uniform(k2, (1, hidden), jnp.float32, -bound1, bound1)
    w2_t = jax.random.uniform(k3, (hidden, out_dim), jnp.float32, -bound2, bound2)
    b2 = jax.random.uniform(k4, (1, out_dim), jnp.float32, -bound2, bound2)
    return w1_t, b1, w2_t, b2


if __name__ == "__main__":
    key = jax.random.PRNGKey(0)
    k_params, k_x = jax.random.split(key)

    INPUT_DIM, HIDDEN, OUT_DIM = 89, 128, 64
    BATCH = 8  # small demo batch; kernel tiles up to 8192 rows for large B

    w1_t, b1, w2_t, b2 = init_params(k_params, INPUT_DIM, (HIDDEN,), OUT_DIM)
    x = jax.random.normal(k_x, (BATCH, INPUT_DIM), jnp.float32)

    # Fold once (static weights), then run the kernel.
    w, b = fold_params(w1_t, b1, w2_t, b2)
    out = organization_model_forward_folded(x, w, b)
    out = jax.block_until_ready(out)

    # Reference check: the original un-folded two-layer math (== PyTorch fwd).
    ref = (x @ w1_t + b1) @ w2_t + b2
    assert out.shape == (BATCH, OUT_DIM), out.shape
    assert jnp.allclose(out, ref, atol=1e-4, rtol=1e-4), float(
        jnp.max(jnp.abs(out - ref))
    )

    print("KERNEL_OK")
</pallas_src>

<mosaic_0001>
module attributes {stable_mosaic.version = 11 : i64} {
  func.func @folded_mlp_kernel(%arg0: i32, %arg1: memref<8x89xf32, #tpu.memory_space<vmem>>, %arg2: memref<89x64xf32, #tpu.memory_space<vmem>>, %arg3: memref<1x64xf32, #tpu.memory_space<vmem>>, %arg4: memref<8x64xf32, #tpu.memory_space<vmem>>) attributes {dimension_semantics = [#tpu.dimension_semantics<parallel>], iteration_bounds = array<i64: 1>, scalar_prefetch = 0 : i64, scratch_operands = 0 : i64, tpu.core_type = #tpu.core_type<tc>, window_params = [{transform_indices = @transform_0, window_bounds = array<i64: 8, 89>}, {pipeline_mode = #tpu.pipeline_mode<synchronous>, transform_indices = @transform_1, window_bounds = array<i64: 89, 64>}, {pipeline_mode = #tpu.pipeline_mode<synchronous>, transform_indices = @transform_2, window_bounds = array<i64: 1, 64>}, {transform_indices = @transform_3, window_bounds = array<i64: 8, 64>}]} {
    %c0 = arith.constant 0 : index
    %c0_0 = arith.constant 0 : index
    %0 = vector.load %arg1[%c0, %c0_0] : memref<8x89xf32, #tpu.memory_space<vmem>>, vector<8x89xf32>
    %c0_1 = arith.constant 0 : index
    %c0_2 = arith.constant 0 : index
    %1 = vector.load %arg2[%c0_1, %c0_2] : memref<89x64xf32, #tpu.memory_space<vmem>>, vector<89x64xf32>
    %cst = arith.constant dense<0.000000e+00> : vector<8x64xf32>
    %2 = tpu.matmul %0, %1, %cst {dimension_numbers = #tpu.dot_dimension_numbers<[1], [0], [0], [1], [0, 0, 1, 1], [], []>} : vector<8x89xf32>, vector<89x64xf32>, vector<8x64xf32> -> vector<8x64xf32>
    %c0_3 = arith.constant 0 : index
    %c0_4 = arith.constant 0 : index
    %3 = vector.load %arg3[%c0_3, %c0_4] : memref<1x64xf32, #tpu.memory_space<vmem>>, vector<1x64xf32>
    %4 = vector.broadcast %3 : vector<1x64xf32> to vector<8x64xf32>
    %5 = arith.addf %2, %4 : vector<8x64xf32>
    %c0_5 = arith.constant 0 : index
    %c0_6 = arith.constant 0 : index
    %6 = vector.load %arg4[%c0_5, %c0_6] : memref<8x64xf32, #tpu.memory_space<vmem>>, vector<8x64xf32>
    tpu.vector_store %arg4[%c0_5, %c0_6], %5 {strides = array<i32>} : memref<8x64xf32, #tpu.memory_space<vmem>>, vector<8x64xf32>,
    return
  }
  func.func @transform_0(%arg0: i32) -> (i32, i32) {
    %c0_i32 = arith.constant 0 : i32
    %c0_i32_0 = arith.constant 0 : i32
    return %arg0, %c0_i32 : i32, i32
  }
  func.func @transform_1(%arg0: i32) -> (i32, i32) {
    %c0_i32 = arith.constant 0 : i32
    %c0_i32_0 = arith.constant 0 : i32
    %c0_i32_1 = arith.constant 0 : i32
    return %c0_i32, %c0_i32_0 : i32, i32
  }
  func.func @transform_2(%arg0: i32) -> (i32, i32) {
    %c0_i32 = arith.constant 0 : i32
    %c0_i32_0 = arith.constant 0 : i32
    %c0_i32_1 = arith.constant 0 : i32
    return %c0_i32, %c0_i32_0 : i32, i32
  }
  func.func @transform_3(%arg0: i32) -> (i32, i32) {
    %c0_i32 = arith.constant 0 : i32
    %c0_i32_0 = arith.constant 0 : i32
    return %arg0, %c0_i32 : i32, i32
  }
}

</mosaic_0001>

<llo_original>
// kernel: tpu_custom_call.1
$region0: #{tpu_custom_call.1}
  #allocation0 [shape = 'u32[]', space=smem, size = 0x4, offset = 0x4, fixed_abs, tag = 'smem constant byte address 0x4 - core index']
  #allocation1 [shape = 'u32[72,128]{1,0:T(1,128)}', space=vmem, size = 0x9000, scoped, tag = 'internal scratch']
  %s0 = inlined_call_operand.vmem [shape: f32[8,89], index: 0, kind: input, shape index: {}]
  %s1 = inlined_call_operand.vmem [shape: f32[89,64], index: 1, kind: input, shape index: {}]
  %s2 = inlined_call_operand.vmem [shape: f32[1,64], index: 2, kind: input, shape index: {}]
  %s3 = inlined_call_operand.hbm [shape: f32[8,64], index: 3, kind: output, shape index: {}]
  %s4 = sld [smem:[#allocation0]]
  $region22: #{tpu_custom_call.1} parent=0
    _
  %s6 = ssub.s32 1, %s4
  %s7 = scalar_select 0, %s6, %s4
  $region1: #{tpu_custom_call.1} parent=0
    #allocation2 [shape = 'u8[4096]{0}', space=vmem, size = 0x1000, scoped, tag = 'output window, operand 0, single buffered']
    #allocation3 [shape = 's32[1]{0}', space=sflag, size = 0x4, scoped, tag = 'scoped memory for tpu_custom_call.1']
    %8 = vsyncpa [#allocation3], 0
    // Predicated region
    $region2: #{tpu_custom_call.1} parent=1 // pred_check
      _
    $region3: #{tpu_custom_call.1} parent=1 // pred_check_branch
      %10 = sbr.rel (0) target = $region5
    $region4: #{tpu_custom_call.1} parent=1 // pred_region
      _
    $region5: #{tpu_custom_call.1} parent=1 // pred_fallthru
      _
    // Predicated region
    $region6: #{tpu_custom_call.1} parent=1 // pred_check
      _
    $region7: #{tpu_custom_call.1} parent=1 // pred_check_branch
      %12 = sbr.rel (0) target = $region9
    $region8: #{tpu_custom_call.1} parent=1 // pred_region
      _
    $region9: #{tpu_custom_call.1} parent=1 // pred_fallthru
      _
    // Predicated region
    $region10: #{tpu_custom_call.1} parent=1 // pred_check
      _
    $region11: #{tpu_custom_call.1} parent=1 // pred_check_branch
      %14 = sbr.rel (0) target = $region13
    $region12: #{tpu_custom_call.1} parent=1 // pred_region
      _
    $region13: #{tpu_custom_call.1} parent=1 // pred_fallthru
      _
    %v15 = vld [vmem:[%s0] sm:$0xff]
    %v16 = vld [vmem:[%s1] sm:$0xff]
    %v17 = vld [vmem:[%s1 + $0x8] sm:$0xff]
    %v18 = vld [vmem:[%s1 + $0x10] sm:$0xff]
    %v19 = vld [vmem:[%s1 + $0x18] sm:$0xff]
    %v20 = vld [vmem:[%s1 + $0x20] sm:$0xff]
    %v21 = vld [vmem:[%s1 + $0x28] sm:$0xff]
    %v22 = vld [vmem:[%s1 + $0x30] sm:$0xff]
    %v23 = vld [vmem:[%s1 + $0x38] sm:$0xff]
    %v24 = vld [vmem:[%s1 + $0x40] sm:$0xff]
    %v25 = vld [vmem:[%s1 + $0x48] sm:$0xff]
    %v26 = vld [vmem:[%s1 + $0x50] sm:$0xff]
    %v27 = vld [vmem:[%s1 + $0x58] sm:$0x1]
    %v28 = vld [vmem:[%s2] sm:$0x1]
    %v30 = vperm.slane %v28, 0
    %vm32 = vcmask 728064
    %v34 = vsel %vm32, %v15, 0
    %vm36 = vcmask 1040384
    %v38 = vsel %vm36, %v27, 0
    %40 = vmatpush.msra.mxu0 0.0
    %41 = vmatpush.msra.mxu0 0.0
    %42 = vmatpush.msra.mxu0 0.0
    %43 = vmatpush.msra.mxu0 0.0
    %44 = vmatpush.msra.mxu0 %v38
    %45 = vmatpush.msra.mxu0 %v26
    %46 = vmatpush.msra.mxu0 %v25
    %47 = vmatpush.msra.mxu0 %v24
    %48 = vmatpush.msra.mxu0 %v23
    %49 = vmatpush.msra.mxu0 %v22
    %50 = vmatpush.msra.mxu0 %v21
    %51 = vmatpush.msra.mxu0 %v20
    %52 = vmatpush.msra.mxu0 %v19
    %53 = vmatpush.msra.mxu0 %v18
    %54 = vmatpush.msra.mxu0 %v17
    %55 = vmatpush.msra.mxu0 %v16
    %56 = vmatmul.f32.gmra.mxu0 %v34
    %v57 = vpop.f32.mrf.mxu0
    %v58 = vadd.f32 %v30, %v57
    %59 = vdwg.mxu0
    %vm60 = vcmask 523264
    %61 = vst.msk [vmem:[#allocation2] sm:$0xff] %vm60, %v58
    // Predicated region
    $region14: #{tpu_custom_call.1} parent=1 // pred_check
      _
    $region15: #{tpu_custom_call.1} parent=1 // pred_check_branch
      %63 = sbr.rel (0) target = $region17
    $region16: #{tpu_custom_call.1} parent=1 // pred_region
      %65 = vsyncadd [#allocation3], 0
      %s67 = sshll.u32 [#allocation2], 4
      %s68 = int_to_ptr.vmem [resolvable:$true] %s67
      %s69 = sshll.u32 %s3, 4
      %s70 = int_to_ptr.hbm [resolvable:$true] %s69
      %72 = dma.vmem_to_hbm [thread:$0]  %s68, 128, %s70, [#allocation3]
    $region17: #{tpu_custom_call.1} parent=1 // pred_fallthru
      _
    // Predicated region
    $region18: #{tpu_custom_call.1} parent=1 // pred_check
      _
    $region19: #{tpu_custom_call.1} parent=1 // pred_check_branch
      %74 = sbr.rel (0) target = $region21
    $region20: #{tpu_custom_call.1} parent=1 // pred_region
      %76 = dma.done [#allocation3], 128
    $region21: #{tpu_custom_call.1} parent=1 // pred_fallthru
      _
    %77 = vsyncpa [#allocation3], 1

</llo_original>
